<compile_context>
chip_gen: v6e
topology: v6e:2x2x1
jax: 0.10.0
libtpu: 0.0.40
codegen_flags: <defaults>
</compile_context>

<pallas_src>
import functools

import jax
import jax.numpy as jnp
from jax.experimental import pallas as pl
from jax.experimental.pallas import tpu as pltpu

LANES = 128                 # TPU lane width; hidden dim is padded to this
OUT_LANES = 8               # narrow output width (n_actions=2, padded to 8 lanes)
# Row offsets inside the packed parameter slab (all multiples of 8 sublanes).
W1_OFF, W1_ROWS = 0, 8      # w1: (n_inputs <= 8, H <= 128), zero-padded
B1_OFF = 8                  # b1: one row
W2_OFF = 16                 # w2: zero-padded to (128, 128)
B2_OFF = 144                # b2: one row
W3_OFF = 152                # w3: zero-padded to (128, 128)
B3_OFF = 280                # b3: one row
SLAB_ROWS = 288             # 288 * 128 * 4 B = 144 KiB, VMEM-resident across the grid


def mlp_kernel(x_ref, slab_ref, o_ref, *, n_inputs):
    x = x_ref[...]                                   # (TB, n_inputs) f32

    # Layer 1: Linear(n_inputs, H) + ReLU.  K = n_inputs (=4) is far too small
    # for the MXU, so do it as n_inputs broadcast multiply-adds on the VPU.
    # The bias broadcast is fused into the first FMA (no materialized broadcast).
    w1 = slab_ref[W1_OFF:W1_OFF + W1_ROWS, :]        # (8, 128); rows >= n_inputs are 0
    b1 = slab_ref[B1_OFF:B1_OFF + 1, :]              # (1, 128); lanes >= H are 0
    h1 = x[:, 0:1] * w1[0:1, :] + b1                 # (TB, 128)
    for k in range(1, n_inputs):
        h1 = h1 + x[:, k:k + 1] * w1[k:k + 1, :]
    h1 = jnp.maximum(h1, 0.0)                        # lanes >= H stay exactly 0

    # Layer 2: Linear(H, H) + ReLU on the MXU (weights zero-padded to 128x128).
    w2 = slab_ref[W2_OFF:W2_OFF + LANES, :]
    b2 = slab_ref[B2_OFF:B2_OFF + 1, :]
    h2 = jnp.maximum(
        jnp.dot(h1, w2, preferred_element_type=jnp.float32) + b2, 0.0)

    # Layer 3: Linear(H, n_actions) on the MXU; only the first OUT_LANES columns
    # are kept, so the HBM writeback is 8 lanes/row instead of 128.
    w3 = slab_ref[W3_OFF:W3_OFF + LANES, :]
    b3 = slab_ref[B3_OFF:B3_OFF + 1, :]
    out = jnp.dot(h2, w3, preferred_element_type=jnp.float32) + b3
    o_ref[...] = out[:, :OUT_LANES].astype(o_ref.dtype)   # narrow (TB, 8) store


def pack_params(params):
    """Pack w1,b1,w2,b2,w3,b3 into a single zero-padded (288, 128) f32 slab."""
    w1, b1, w2, b2, w3, b3 = (params[k] for k in ("w1", "b1", "w2", "b2", "w3", "b3"))
    n_inputs, h = w1.shape
    n_actions = w3.shape[1]
    assert n_inputs <= W1_ROWS and h <= LANES and n_actions <= OUT_LANES
    slab = jnp.zeros((SLAB_ROWS, LANES), jnp.float32)
    slab = slab.at[W1_OFF:W1_OFF + n_inputs, :h].set(w1)
    slab = slab.at[B1_OFF, :h].set(b1.reshape(-1))
    slab = slab.at[W2_OFF:W2_OFF + h, :h].set(w2)
    slab = slab.at[B2_OFF, :h].set(b2.reshape(-1))
    slab = slab.at[W3_OFF:W3_OFF + h, :n_actions].set(w3)
    slab = slab.at[B3_OFF, :n_actions].set(b3.reshape(-1))
    return slab


def _round_up(n, m):
    return ((n + m - 1) // m) * m


def _cdiv(a, b):
    return -(-a // b)


def dqn_forward(x, slab, n_actions, *, tb_max=2048, min_parallel_tiles=2):
    """x: (B, n_inputs) f32. slab: packed params from pack_params()."""
    B, n_inputs = x.shape
    # Packed-slab layout invariants (silent corruption otherwise).
    assert n_inputs <= W1_ROWS, "n_inputs exceeds packed-slab layout"
    assert n_actions <= OUT_LANES, "n_actions exceeds narrow output width"
    assert slab.shape == (SLAB_ROWS, LANES)

    # Tile selection: few large tiles (amortize per-grid-step overhead), minimal
    # batch padding, and >= 2 tiles for medium/large batches so v7x's two
    # TensorCores both get a shard of the "parallel" batch axis.
    n_tiles = max(_cdiv(B, tb_max), 1)
    if B > 256 and n_tiles < min_parallel_tiles:
        n_tiles = min_parallel_tiles
    tb = _round_up(_cdiv(B, n_tiles), 8)             # batch tile (multiple of 8)
    b_pad = n_tiles * tb
    if b_pad != B:
        x = jnp.pad(x, ((0, b_pad - B), (0, 0)))

    out = pl.pallas_call(
        functools.partial(mlp_kernel, n_inputs=n_inputs),
        out_shape=jax.ShapeDtypeStruct((b_pad, OUT_LANES), jnp.float32),
        grid=(n_tiles,),
        in_specs=[
            pl.BlockSpec((tb, n_inputs), lambda i: (i, 0)),      # batch-tiled input
            pl.BlockSpec((SLAB_ROWS, LANES), lambda i: (0, 0)),  # resident weights
        ],
        out_specs=pl.BlockSpec((tb, OUT_LANES), lambda i: (i, 0)),
        compiler_params=pltpu.CompilerParams(
            dimension_semantics=("parallel",),
            vmem_limit_bytes=32 * 1024 * 1024),
    )(x, slab)
    return out[:B, :n_actions]


def init_params(key, n_inputs=4, n_neurons=32, n_actions=2):
    """Deterministic init mimicking torch.nn.Linear default (U(-1/sqrt(fan_in), +))."""
    ks = jax.random.split(key, 6)

    def linear(kw, kb, fan_in, fan_out):
        bound = 1.0 / jnp.sqrt(jnp.float32(fan_in))
        # stored as (in, out) so the kernel computes x @ W
        w = jax.random.uniform(kw, (fan_in, fan_out), jnp.float32, -bound, bound)
        b = jax.random.uniform(kb, (1, fan_out), jnp.float32, -bound, bound)
        return w, b

    w1, b1 = linear(ks[0], ks[1], n_inputs, n_neurons)
    w2, b2 = linear(ks[2], ks[3], n_neurons, n_neurons)
    w3, b3 = linear(ks[4], ks[5], n_neurons, n_actions)
    return dict(w1=w1, b1=b1, w2=w2, b2=b2, w3=w3, b3=b3)


def reference_forward(x, p):
    h1 = jnp.maximum(x @ p["w1"] + p["b1"], 0.0)
    h2 = jnp.maximum(h1 @ p["w2"] + p["b2"], 0.0)
    return h2 @ p["w3"] + p["b3"]


if __name__ == "__main__":
    key = jax.random.PRNGKey(0)
    kx, kp = jax.random.split(key)

    B, N_INPUTS, N_NEURONS, N_ACTIONS = 8, 4, 32, 2
    x = jax.random.normal(kx, (B, N_INPUTS), jnp.float32)
    params = init_params(kp, N_INPUTS, N_NEURONS, N_ACTIONS)
    slab = pack_params(params)

    q_values = dqn_forward(x, slab, N_ACTIONS)
    jax.block_until_ready(q_values)

    ref = reference_forward(x, params)
    assert q_values.shape == (B, N_ACTIONS)
    assert jnp.allclose(q_values, ref, atol=1e-5, rtol=1e-5), "mismatch vs JAX reference"

    # TODO(synk): takeAction's epsilon-greedy / gym env interaction is host-side
    # control flow, not a tensor op, so it stays outside the kernel.
    print("KERNEL_OK")
</pallas_src>

<mosaic_0001>
module attributes {stable_mosaic.version = 11 : i64} {
  func.func @mlp_kernel(%arg0: i32, %arg1: memref<8x4xf32, #tpu.memory_space<vmem>>, %arg2: memref<288x128xf32, #tpu.memory_space<vmem>>, %arg3: memref<8x8xf32, #tpu.memory_space<vmem>>) attributes {dimension_semantics = [#tpu.dimension_semantics<parallel>], iteration_bounds = array<i64: 1>, scalar_prefetch = 0 : i64, scratch_operands = 0 : i64, tpu.core_type = #tpu.core_type<tc>, window_params = [{transform_indices = @transform_0, window_bounds = array<i64: 8, 4>}, {pipeline_mode = #tpu.pipeline_mode<synchronous>, transform_indices = @transform_1, window_bounds = array<i64: 288, 128>}, {transform_indices = @transform_2, window_bounds = array<i64: 8, 8>}]} {
    %c0 = arith.constant 0 : index
    %c0_0 = arith.constant 0 : index
    %0 = vector.load %arg1[%c0, %c0_0] : memref<8x4xf32, #tpu.memory_space<vmem>>, vector<8x4xf32>
    %c0_1 = arith.constant 0 : index
    %c0_2 = arith.constant 0 : index
    %1 = vector.load %arg2[%c0_1, %c0_2] : memref<288x128xf32, #tpu.memory_space<vmem>>, vector<8x128xf32>
    %c8 = arith.constant 8 : index
    %c0_3 = arith.constant 0 : index
    %2 = vector.load %arg2[%c8, %c0_3] : memref<288x128xf32, #tpu.memory_space<vmem>>, vector<1x128xf32>
    %3 = vector.extract_strided_slice %0 {offsets = [0, 0], sizes = [8, 1], strides = [1, 1]} : vector<8x4xf32> to vector<8x1xf32>
    %4 = vector.extract_strided_slice %1 {offsets = [0, 0], sizes = [1, 128], strides = [1, 1]} : vector<8x128xf32> to vector<1x128xf32>
    %5 = vector.broadcast %3 : vector<8x1xf32> to vector<8x128xf32>
    %6 = vector.broadcast %4 : vector<1x128xf32> to vector<8x128xf32>
    %7 = arith.mulf %5, %6 : vector<8x128xf32>
    %8 = vector.broadcast %2 : vector<1x128xf32> to vector<8x128xf32>
    %9 = arith.addf %7, %8 : vector<8x128xf32>
    %10 = vector.extract_strided_slice %0 {offsets = [0, 1], sizes = [8, 1], strides = [1, 1]} : vector<8x4xf32> to vector<8x1xf32>
    %11 = vector.extract_strided_slice %1 {offsets = [1, 0], sizes = [1, 128], strides = [1, 1]} : vector<8x128xf32> to vector<1x128xf32>
    %12 = vector.broadcast %10 : vector<8x1xf32> to vector<8x128xf32>
    %13 = vector.broadcast %11 : vector<1x128xf32> to vector<8x128xf32>
    %14 = arith.mulf %12, %13 : vector<8x128xf32>
    %15 = arith.addf %9, %14 : vector<8x128xf32>
    %16 = vector.extract_strided_slice %0 {offsets = [0, 2], sizes = [8, 1], strides = [1, 1]} : vector<8x4xf32> to vector<8x1xf32>
    %17 = vector.extract_strided_slice %1 {offsets = [2, 0], sizes = [1, 128], strides = [1, 1]} : vector<8x128xf32> to vector<1x128xf32>
    %18 = vector.broadcast %16 : vector<8x1xf32> to vector<8x128xf32>
    %19 = vector.broadcast %17 : vector<1x128xf32> to vector<8x128xf32>
    %20 = arith.mulf %18, %19 : vector<8x128xf32>
    %21 = arith.addf %15, %20 : vector<8x128xf32>
    %22 = vector.extract_strided_slice %0 {offsets = [0, 3], sizes = [8, 1], strides = [1, 1]} : vector<8x4xf32> to vector<8x1xf32>
    %23 = vector.extract_strided_slice %1 {offsets = [3, 0], sizes = [1, 128], strides = [1, 1]} : vector<8x128xf32> to vector<1x128xf32>
    %24 = vector.broadcast %22 : vector<8x1xf32> to vector<8x128xf32>
    %25 = vector.broadcast %23 : vector<1x128xf32> to vector<8x128xf32>
    %26 = arith.mulf %24, %25 : vector<8x128xf32>
    %27 = arith.addf %21, %26 : vector<8x128xf32>
    %cst = arith.constant 0.000000e+00 : f32
    %28 = vector.broadcast %cst : f32 to vector<8x128xf32>
    %29 = arith.maximumf %27, %28 : vector<8x128xf32>
    %c16 = arith.constant 16 : index
    %c0_4 = arith.constant 0 : index
    %30 = vector.load %arg2[%c16, %c0_4] : memref<288x128xf32, #tpu.memory_space<vmem>>, vector<128x128xf32>
    %c144 = arith.constant 144 : index
    %c0_5 = arith.constant 0 : index
    %31 = vector.load %arg2[%c144, %c0_5] : memref<288x128xf32, #tpu.memory_space<vmem>>, vector<1x128xf32>
    %cst_6 = arith.constant dense<0.000000e+00> : vector<8x128xf32>
    %32 = tpu.matmul %29, %30, %cst_6 {dimension_numbers = #tpu.dot_dimension_numbers<[1], [0], [0], [1], [0, 0, 1, 1], [], []>} : vector<8x128xf32>, vector<128x128xf32>, vector<8x128xf32> -> vector<8x128xf32>
    %33 = vector.broadcast %31 : vector<1x128xf32> to vector<8x128xf32>
    %34 = arith.addf %32, %33 : vector<8x128xf32>
    %cst_7 = arith.constant 0.000000e+00 : f32
    %35 = vector.broadcast %cst_7 : f32 to vector<8x128xf32>
    %36 = arith.maximumf %34, %35 : vector<8x128xf32>
    %c152 = arith.constant 152 : index
    %c0_8 = arith.constant 0 : index
    %37 = vector.load %arg2[%c152, %c0_8] : memref<288x128xf32, #tpu.memory_space<vmem>>, vector<128x128xf32>
    %c280 = arith.constant 280 : index
    %c0_9 = arith.constant 0 : index
    %38 = vector.load %arg2[%c280, %c0_9] : memref<288x128xf32, #tpu.memory_space<vmem>>, vector<1x128xf32>
    %cst_10 = arith.constant dense<0.000000e+00> : vector<8x128xf32>
    %39 = tpu.matmul %36, %37, %cst_10 {dimension_numbers = #tpu.dot_dimension_numbers<[1], [0], [0], [1], [0, 0, 1, 1], [], []>} : vector<8x128xf32>, vector<128x128xf32>, vector<8x128xf32> -> vector<8x128xf32>
    %40 = vector.broadcast %38 : vector<1x128xf32> to vector<8x128xf32>
    %41 = arith.addf %39, %40 : vector<8x128xf32>
    %42 = vector.extract_strided_slice %41 {offsets = [0, 0], sizes = [8, 8], strides = [1, 1]} : vector<8x128xf32> to vector<8x8xf32>
    %c0_11 = arith.constant 0 : index
    %c0_12 = arith.constant 0 : index
    %43 = vector.load %arg3[%c0_11, %c0_12] : memref<8x8xf32, #tpu.memory_space<vmem>>, vector<8x8xf32>
    tpu.vector_store %arg3[%c0_11, %c0_12], %42 {strides = array<i32>} : memref<8x8xf32, #tpu.memory_space<vmem>>, vector<8x8xf32>,
    return
  }
  func.func @transform_0(%arg0: i32) -> (i32, i32) {
    %c0_i32 = arith.constant 0 : i32
    %c0_i32_0 = arith.constant 0 : i32
    return %arg0, %c0_i32 : i32, i32
  }
  func.func @transform_1(%arg0: i32) -> (i32, i32) {
    %c0_i32 = arith.constant 0 : i32
    %c0_i32_0 = arith.constant 0 : i32
    %c0_i32_1 = arith.constant 0 : i32
    return %c0_i32, %c0_i32_0 : i32, i32
  }
  func.func @transform_2(%arg0: i32) -> (i32, i32) {
    %c0_i32 = arith.constant 0 : i32
    %c0_i32_0 = arith.constant 0 : i32
    return %arg0, %c0_i32 : i32, i32
  }
}

</mosaic_0001>

<llo_original>
// kernel: tpu_custom_call.1
$region0: #{tpu_custom_call.1}
  #allocation0 [shape = 'u32[]', space=smem, size = 0x4, offset = 0x4, fixed_abs, tag = 'smem constant byte address 0x4 - core index']
  #allocation1 [shape = 'u32[144,128]{1,0:T(1,128)}', space=vmem, size = 0x12000, scoped, tag = 'internal scratch']
  %s0 = inlined_call_operand.vmem [shape: f32[8,4], index: 0, kind: input, shape index: {}]
  %s1 = inlined_call_operand.hbm [shape: f32[288,128], index: 1, kind: input, shape index: {}]
  %s2 = inlined_call_operand.hbm [shape: f32[8,8], index: 2, kind: output, shape index: {}]
  %s3 = sld [smem:[#allocation0]]
  $region22: #{tpu_custom_call.1} parent=0
    _
  %s5 = ssub.s32 1, %s3
  %s6 = scalar_select 0, %s5, %s3
  $region1: #{tpu_custom_call.1} parent=0
    #allocation2 [shape = 'u8[147456]{0}', space=vmem, size = 0x24000, scoped, tag = 'input window, operand 1, single buffered']
    #allocation3 [shape = 's32[1]{0}', space=sflag, size = 0x4, scoped, tag = 'scoped memory for tpu_custom_call.1']
    #allocation4 [shape = 's32[1]{0}', space=sflag, size = 0x4, scoped, tag = 'scoped memory for tpu_custom_call.1']
    #allocation5 [shape = 'u8[4096]{0}', space=vmem, size = 0x1000, scoped, tag = 'output window, operand 0, single buffered']
    %7 = vsyncpa [#allocation3], 0
    %8 = vsyncpa [#allocation4], 0
    // Predicated region
    $region2: #{tpu_custom_call.1} parent=1 // pred_check
      _
    $region3: #{tpu_custom_call.1} parent=1 // pred_check_branch
      %10 = sbr.rel (0) target = $region5
    $region4: #{tpu_custom_call.1} parent=1 // pred_region
      _
    $region5: #{tpu_custom_call.1} parent=1 // pred_fallthru
      _
    // Predicated region
    $region6: #{tpu_custom_call.1} parent=1 // pred_check
      _
    $region7: #{tpu_custom_call.1} parent=1 // pred_check_branch
      %12 = sbr.rel (0) target = $region9
    $region8: #{tpu_custom_call.1} parent=1 // pred_region
      %s14 = ssub.s32 4608, 4608
      %15 = vsyncadd [#allocation3], %s14
      %s16 = sshll.u32 [#allocation2], 4
      %s17 = int_to_ptr.vmem [resolvable:$true] %s16
      %22 = dma.hbm_to_vmem [thread:$0]  %s1, 4608, %s17, [#allocation3], 128, 128, 8
    $region9: #{tpu_custom_call.1} parent=1 // pred_fallthru
      _
    // Predicated region
    $region10: #{tpu_custom_call.1} parent=1 // pred_check
      _
    $region11: #{tpu_custom_call.1} parent=1 // pred_check_branch
      %24 = sbr.rel (0) target = $region13
    $region12: #{tpu_custom_call.1} parent=1 // pred_region
      %25 = dma.done [#allocation3], 4608
    $region13: #{tpu_custom_call.1} parent=1 // pred_fallthru
      _
    %v26 = vld [vmem:[%s0] sm:$0xff]
    %v27 = vld [vmem:[#allocation2] sm:$0xff]
    %v28 = vld [vmem:[#allocation2 + $0x8] sm:$0x1]
    %30 = vset.pattern.permute.xlu0 0
    %31 = vperm.xlu0 %30, %v26
    %v32 = vpop.permute.xlu0 %31
    %v34 = vlaneseq
    %v35 = vshrl.u32 %v34, 7
    %v36 = vsub.s32 0, %v35
    %v37 = vrot.slane %v27, %v36
    %v38 = vmul.f32 %v32, %v37
    %v39 = vlaneseq
    %v40 = vshrl.u32 %v39, 7
    %v41 = vsub.s32 0, %v40
    %v42 = vrot.slane %v28, %v41
    %v43 = vadd.f32 %v38, %v42
    %44 = vset.pattern.permute.xlu0 1
    %45 = vperm.xlu0 %44, %v26
    %v46 = vpop.permute.xlu0 %45
    %v48 = vlaneseq
    %v49 = vshrl.u32 %v48, 7
    %v50 = vsub.s32 1, %v49
    %v51 = vrot.slane %v27, %v50
    %v52 = vmul.f32 %v46, %v51
    %v53 = vadd.f32 %v43, %v52
    %54 = vset.pattern.permute.xlu0 2
    %55 = vperm.xlu0 %54, %v26
    %v56 = vpop.permute.xlu0 %55
    %v58 = vlaneseq
    %v59 = vshrl.u32 %v58, 7
    %v60 = vsub.s32 2, %v59
    %v61 = vrot.slane %v27, %v60
    %v62 = vmul.f32 %v56, %v61
    %v63 = vadd.f32 %v53, %v62
    %64 = vset.pattern.permute.xlu0 3
    %65 = vperm.xlu0 %64, %v26
    %v66 = vpop.permute.xlu0 %65
    %v68 = vlaneseq
    %v69 = vshrl.u32 %v68, 7
    %v70 = vsub.s32 3, %v69
    %v71 = vrot.slane %v27, %v70
    %v72 = vmul.f32 %v66, %v71
    %v73 = vadd.f32 %v63, %v72
    %v74 = vmax.f32 %v73, 0.0
    %v75 = vld [vmem:[#allocation2 + $0x10] sm:$0xff]
    %v76 = vld [vmem:[#allocation2 + $0x18] sm:$0xff]
    %v77 = vld [vmem:[#allocation2 + $0x20] sm:$0xff]
    %v78 = vld [vmem:[#allocation2 + $0x28] sm:$0xff]
    %v79 = vld [vmem:[#allocation2 + $0x30] sm:$0xff]
    %v80 = vld [vmem:[#allocation2 + $0x38] sm:$0xff]
    %v81 = vld [vmem:[#allocation2 + $0x40] sm:$0xff]
    %v82 = vld [vmem:[#allocation2 + $0x48] sm:$0xff]
    %v83 = vld [vmem:[#allocation2 + $0x50] sm:$0xff]
    %v84 = vld [vmem:[#allocation2 + $0x58] sm:$0xff]
    %v85 = vld [vmem:[#allocation2 + $0x60] sm:$0xff]
    %v86 = vld [vmem:[#allocation2 + $0x68] sm:$0xff]
    %v87 = vld [vmem:[#allocation2 + $0x70] sm:$0xff]
    %v88 = vld [vmem:[#allocation2 + $0x78] sm:$0xff]
    %v89 = vld [vmem:[#allocation2 + $0x80] sm:$0xff]
    %v90 = vld [vmem:[#allocation2 + $0x88] sm:$0xff]
    %v91 = vld [vmem:[#allocation2 + $0x90] sm:$0x1]
    %v92 = vlaneseq
    %v93 = vshrl.u32 %v92, 7
    %v94 = vsub.s32 0, %v93
    %v95 = vrot.slane %v91, %v94
    %96 = vmatprep.subr.mxu0 0.0
    %97 = vmatpush1.msra.mxu0 %v90
    %98 = vmatprep.subr.mxu0 0.0
    %99 = vmatpush1.msra.mxu0 %v89
    %100 = vmatprep.subr.mxu0 0.0
    %101 = vmatpush1.msra.mxu0 %v88
    %102 = vmatprep.subr.mxu0 0.0
    %103 = vmatpush1.msra.mxu0 %v87
    %104 = vmatprep.subr.mxu0 0.0
    %105 = vmatpush1.msra.mxu0 %v86
    %106 = vmatprep.subr.mxu0 0.0
    %107 = vmatpush1.msra.mxu0 %v85
    %108 = vmatprep.subr.mxu0 0.0
    %109 = vmatpush1.msra.mxu0 %v84
    %110 = vmatprep.subr.mxu0 0.0
    %111 = vmatpush1.msra.mxu0 %v83
    %112 = vmatprep.subr.mxu0 0.0
    %113 = vmatpush1.msra.mxu0 %v82
    %114 = vmatprep.subr.mxu0 0.0
    %115 = vmatpush1.msra.mxu0 %v81
    %116 = vmatprep.subr.mxu0 0.0
    %117 = vmatpush1.msra.mxu0 %v80
    %118 = vmatprep.subr.mxu0 0.0
    %119 = vmatpush1.msra.mxu0 %v79
    %120 = vmatprep.subr.mxu0 0.0
    %121 = vmatpush1.msra.mxu0 %v78
    %122 = vmatprep.subr.mxu0 0.0
    %123 = vmatpush1.msra.mxu0 %v77
    %124 = vmatprep.subr.mxu0 0.0
    %125 = vmatpush1.msra.mxu0 %v76
    %126 = vmatprep.subr.mxu0 0.0
    %127 = vmatpush1.msra.mxu0 %v75
    %128 = vmatprep.subr.mxu0 0.0
    %129 = vmatpush2.msra.mxu0 0.0
    %130 = vmatprep.subr.mxu0 0.0
    %131 = vmatpush2.msra.mxu0 0.0
    %132 = vmatprep.subr.mxu0 0.0
    %133 = vmatpush2.msra.mxu0 0.0
    %134 = vmatprep.subr.mxu0 0.0
    %135 = vmatpush2.msra.mxu0 0.0
    %136 = vmatprep.subr.mxu0 0.0
    %137 = vmatpush2.msra.mxu0 0.0
    %138 = vmatprep.subr.mxu0 0.0
    %139 = vmatpush2.msra.mxu0 0.0
    %140 = vmatprep.subr.mxu0 0.0
    %141 = vmatpush2.msra.mxu0 0.0
    %142 = vmatprep.subr.mxu0 0.0
    %143 = vmatpush2.msra.mxu0 0.0
    %144 = vmatprep.subr.mxu0 0.0
    %145 = vmatpush2.msra.mxu0 0.0
    %146 = vmatprep.subr.mxu0 0.0
    %147 = vmatpush2.msra.mxu0 0.0
    %148 = vmatprep.subr.mxu0 0.0
    %149 = vmatpush2.msra.mxu0 0.0
    %150 = vmatprep.subr.mxu0 0.0
    %151 = vmatpush2.msra.mxu0 0.0
    %152 = vmatprep.subr.mxu0 0.0
    %153 = vmatpush2.msra.mxu0 0.0
    %154 = vmatprep.subr.mxu0 0.0
    %155 = vmatpush2.msra.mxu0 0.0
    %156 = vmatprep.subr.mxu0 0.0
    %157 = vmatpush2.msra.mxu0 0.0
    %158 = vmatprep.subr.mxu0 0.0
    %159 = vmatpush2.msra.mxu0 0.0
    %160 = vmatprep.mubr.f32.mxu0 0.0
    %161 = vmatmul.mubr.f32.gmra.mxu0 %v74
    %v162 = vpop.f32.mrf.mxu0
    %v163 = vadd.f32 %v95, %v162
    %v164 = vpop.f32.mrf.mxu0
    %165 = vdwg.mxu0
    %v166 = vmax.f32 %v163, 0.0
    %v167 = vld [vmem:[#allocation2 + $0x98] sm:$0xff]
    %v168 = vld [vmem:[#allocation2 + $0xa0] sm:$0xff]
    %v169 = vld [vmem:[#allocation2 + $0xa8] sm:$0xff]
    %v170 = vld [vmem:[#allocation2 + $0xb0] sm:$0xff]
    %v171 = vld [vmem:[#allocation2 + $0xb8] sm:$0xff]
    %v172 = vld [vmem:[#allocation2 + $0xc0] sm:$0xff]
    %v173 = vld [vmem:[#allocation2 + $0xc8] sm:$0xff]
    %v174 = vld [vmem:[#allocation2 + $0xd0] sm:$0xff]
    %v175 = vld [vmem:[#allocation2 + $0xd8] sm:$0xff]
    %v176 = vld [vmem:[#allocation2 + $0xe0] sm:$0xff]
    %v177 = vld [vmem:[#allocation2 + $0xe8] sm:$0xff]
    %v178 = vld [vmem:[#allocation2 + $0xf0] sm:$0xff]
    %v179 = vld [vmem:[#allocation2 + $0xf8] sm:$0xff]
    %v180 = vld [vmem:[#allocation2 + $0x100] sm:$0xff]
    %v181 = vld [vmem:[#allocation2 + $0x108] sm:$0xff]
    %v182 = vld [vmem:[#allocation2 + $0x110] sm:$0xff]
    %v183 = vld [vmem:[#allocation2 + $0x118] sm:$0x1]
    %v184 = vlaneseq
    %v185 = vshrl.u32 %v184, 7
    %v186 = vsub.s32 0, %v185
    %v187 = vrot.slane %v183, %v186
    %188 = vmatprep.subr.mxu0 0.0
    %189 = vmatpush1.msra.mxu0 %v182
    %190 = vmatprep.subr.mxu0 0.0
    %191 = vmatpush1.msra.mxu0 %v181
    %192 = vmatprep.subr.mxu0 0.0
    %193 = vmatpush1.msra.mxu0 %v180
    %194 = vmatprep.subr.mxu0 0.0
    %195 = vmatpush1.msra.mxu0 %v179
    %196 = vmatprep.subr.mxu0 0.0
    %197 = vmatpush1.msra.mxu0 %v178
    %198 = vmatprep.subr.mxu0 0.0
    %199 = vmatpush1.msra.mxu0 %v177
    %200 = vmatprep.subr.mxu0 0.0
    %201 = vmatpush1.msra.mxu0 %v176
    %202 = vmatprep.subr.mxu0 0.0
    %203 = vmatpush1.msra.mxu0 %v175
    %204 = vmatprep.subr.mxu0 0.0
    %205 = vmatpush1.msra.mxu0 %v174
    %206 = vmatprep.subr.mxu0 0.0
    %207 = vmatpush1.msra.mxu0 %v173
    %208 = vmatprep.subr.mxu0 0.0
    %209 = vmatpush1.msra.mxu0 %v172
    %210 = vmatprep.subr.mxu0 0.0
    %211 = vmatpush1.msra.mxu0 %v171
    %212 = vmatprep.subr.mxu0 0.0
    %213 = vmatpush1.msra.mxu0 %v170
    %214 = vmatprep.subr.mxu0 0.0
    %215 = vmatpush1.msra.mxu0 %v169
    %216 = vmatprep.subr.mxu0 0.0
    %217 = vmatpush1.msra.mxu0 %v168
    %218 = vmatprep.subr.mxu0 0.0
    %219 = vmatpush1.msra.mxu0 %v167
    %220 = vmatprep.subr.mxu0 0.0
    %221 = vmatpush2.msra.mxu0 0.0
    %222 = vmatprep.subr.mxu0 0.0
    %223 = vmatpush2.msra.mxu0 0.0
    %224 = vmatprep.subr.mxu0 0.0
    %225 = vmatpush2.msra.mxu0 0.0
    %226 = vmatprep.subr.mxu0 0.0
    %227 = vmatpush2.msra.mxu0 0.0
    %228 = vmatprep.subr.mxu0 0.0
    %229 = vmatpush2.msra.mxu0 0.0
    %230 = vmatprep.subr.mxu0 0.0
    %231 = vmatpush2.msra.mxu0 0.0
    %232 = vmatprep.subr.mxu0 0.0
    %233 = vmatpush2.msra.mxu0 0.0
    %234 = vmatprep.subr.mxu0 0.0
    %235 = vmatpush2.msra.mxu0 0.0
    %236 = vmatprep.subr.mxu0 0.0
    %237 = vmatpush2.msra.mxu0 0.0
    %238 = vmatprep.subr.mxu0 0.0
    %239 = vmatpush2.msra.mxu0 0.0
    %240 = vmatprep.subr.mxu0 0.0
    %241 = vmatpush2.msra.mxu0 0.0
    %242 = vmatprep.subr.mxu0 0.0
    %243 = vmatpush2.msra.mxu0 0.0
    %244 = vmatprep.subr.mxu0 0.0
    %245 = vmatpush2.msra.mxu0 0.0
    %246 = vmatprep.subr.mxu0 0.0
    %247 = vmatpush2.msra.mxu0 0.0
    %248 = vmatprep.subr.mxu0 0.0
    %249 = vmatpush2.msra.mxu0 0.0
    %250 = vmatprep.subr.mxu0 0.0
    %251 = vmatpush2.msra.mxu0 0.0
    %252 = vmatprep.mubr.f32.mxu0 0.0
    %253 = vmatmul.mubr.f32.gmra.mxu0 %v166
    %v254 = vpop.f32.mrf.mxu0
    %v255 = vadd.f32 %v187, %v254
    %v256 = vpop.f32.mrf.mxu0
    %257 = vdwg.mxu0
    %vm258 = vcmask 64512
    %259 = vst.msk [vmem:[#allocation5] sm:$0xff] %vm258, %v255
    // Predicated region
    $region14: #{tpu_custom_call.1} parent=1 // pred_check
      _
    $region15: #{tpu_custom_call.1} parent=1 // pred_check_branch
      %261 = sbr.rel (0) target = $region17
    $region16: #{tpu_custom_call.1} parent=1 // pred_region
      %s263 = ssub.s32 128, 128
      %264 = vsyncadd [#allocation4], %s263
      %s266 = sshll.u32 [#allocation5], 4
      %s267 = int_to_ptr.vmem [resolvable:$true] %s266
      %269 = dma.vmem_to_hbm [thread:$0]  %s267, 128, %s2, [#allocation4]
    $region17: #{tpu_custom_call.1} parent=1 // pred_fallthru
      _
    // Predicated region
    $region18: #{tpu_custom_call.1} parent=1 // pred_check
      _
    $region19: #{tpu_custom_call.1} parent=1 // pred_check_branch
      %271 = sbr.rel (0) target = $region21
    $region20: #{tpu_custom_call.1} parent=1 // pred_region
      %272 = dma.done [#allocation4], 128
    $region21: #{tpu_custom_call.1} parent=1 // pred_fallthru
      _
    %273 = vsyncpa [#allocation3], 1
    %274 = vsyncpa [#allocation4], 1

</llo_original>
